<compile_context>
chip_gen: v5e
topology: v5e:2x2
jax: 0.10.0
libtpu: 0.0.40
codegen_flags: <defaults>
</compile_context>

<pallas_src>
import functools

import jax
import jax.numpy as jnp
from jax.experimental import pallas as pl
from jax.experimental.pallas import tpu as pltpu


_BLOCK_ELEMS = 2048 * 512          # ~4 MiB f32 per input block per grid step
_GROUP_ELEMS = 8 * 512             # rows processed per inner-loop step, held in vregs
_VMEM_LIMIT_BYTES = 48 * 1024 * 1024


def _choose_lane(total):
    """Largest lane width in (512, 256, 128) dividing `total`; else pad to 128."""
    for lane in (512, 256, 128):
        if total % lane == 0:
            return lane, 0
    return 128, (-total) % 128


def _make_combined_loss_kernel(*, inner, tile_m, lane, group, n_valid_rows, masked):
    """Builds the fused SSE+SAE accumulation kernel for one static config.

    Grid is (chunks, inner): outer axis = independent row-chunks ("parallel",
    megacore-shardable), inner axis = sequential reduction ("arbitrary").
    Partial sums live in VMEM scratch across the inner axis; the per-chunk
    lane-folded result is written once, on the last inner step.
    """
    n_groups = tile_m // group

    def kernel(x_ref, y_ref, out_ref, psq_ref, pab_ref):
        p = pl.program_id(0)
        i = pl.program_id(1)

        @pl.when(i == 0)
        def _init():
            psq_ref[...] = jnp.zeros_like(psq_ref)
            pab_ref[...] = jnp.zeros_like(pab_ref)

        if masked:
            # Logical (unclamped) global row offset of this tile; rows at or
            # beyond n_valid_rows are garbage (partial DMA / phantom tile).
            row0 = (p * inner + i) * tile_m
            row_iota = jax.lax.broadcasted_iota(jnp.int32, (group, 1), 0)

        def body(g, carry):
            sq, ab = carry
            r = pl.multiple_of(g * group, group)
            xv = x_ref[pl.ds(r, group), :].astype(jnp.float32)
            yv = y_ref[pl.ds(r, group), :].astype(jnp.float32)
            d = xv - yv
            if masked:
                valid = (row0 + r + row_iota) < n_valid_rows
                d = jnp.where(valid, d, 0.0)
            # Pure-VPU whole-vreg ops; carries stay in vregs (no per-group vst).
            return sq + d * d, ab + jnp.abs(d)

        zeros = jnp.zeros((group, lane), jnp.float32)
        sq, ab = jax.lax.fori_loop(0, n_groups, body, (zeros, zeros),
                                   unroll=min(8, n_groups))
        psq_ref[...] += sq
        pab_ref[...] += ab

        @pl.when(i == inner - 1)
        def _finalize():
            # Fold 128-lane columns (vreg-aligned static slices) so the output
            # DMA is a small lane-dense (group, 128) slab per quantity.
            def lane_fold(a):
                acc = a[:, 0:128]
                for c in range(128, lane, 128):
                    acc = acc + a[:, c:c + 128]
                return acc
            out_ref[0, 0] = lane_fold(psq_ref[...])
            out_ref[0, 1] = lane_fold(pab_ref[...])

    return kernel


@functools.partial(jax.jit, static_argnames=("weights",))
def combined_loss_pallas(x, y, weights=(0.6, 0.4)):
    w0, w1 = float(weights[0]), float(weights[1])
    total = x.size
    inv_n = 1.0 / float(total)

    lane, pad_flat = _choose_lane(total)
    group = max(8, _GROUP_ELEMS // lane)

    fx = x.reshape(-1)
    fy = y.reshape(-1)
    m_rows = (total + pad_flat) // lane            # valid rows of the (M, lane) view
    tile_cap = _BLOCK_ELEMS // lane                # rows per big streaming tile

    if m_rows <= tile_cap:
        # Single-block fast path: one grid step over the whole (row-padded) array.
        tile_m = -(-m_rows // group) * group
        num_tiles = 1
        num_chunks, inner = 1, 1
        pad_rows = tile_m - m_rows
        masked = False
    else:
        # Multi-tile streaming path: no padding, ragged tail masked in-kernel.
        tile_m = tile_cap
        num_tiles = -(-m_rows // tile_m)
        num_chunks = 2 if num_tiles >= 2 else 1    # unconditional megacore split
        inner = -(-num_tiles // num_chunks)
        pad_rows = 0
        masked = (m_rows % tile_m != 0) or (num_chunks * inner != num_tiles)

    total_pad = pad_flat + pad_rows * lane
    if total_pad:
        # TODO(synk): only sizes not divisible by 128 (or tiny single-block
        # inputs) take this small pad copy; large lane-aligned tensors stream
        # straight from HBM with in-kernel tail masking (no extra HBM traffic).
        fx = jnp.pad(fx, (0, total_pad))
        fy = jnp.pad(fy, (0, total_pad))
    x2 = fx.reshape(m_rows + pad_rows, lane)
    y2 = fy.reshape(m_rows + pad_rows, lane)

    last_block = num_tiles - 1

    def in_map(p, i):
        t = p * inner + i
        if masked:
            # Phantom tile slots (odd tile counts split over 2 chunks) re-read
            # the last real block; their rows are fully masked in the kernel.
            t = jnp.minimum(t, last_block)
        return (t, 0)

    out_map = lambda p, i: (p, 0, 0, 0)            # noqa: E731

    kernel = _make_combined_loss_kernel(
        inner=inner, tile_m=tile_m, lane=lane, group=group,
        n_valid_rows=m_rows, masked=masked)

    out = pl.pallas_call(
        kernel,
        out_shape=jax.ShapeDtypeStruct((num_chunks, 2, group, 128), jnp.float32),
        grid_spec=pltpu.PrefetchScalarGridSpec(
            num_scalar_prefetch=0,
            grid=(num_chunks, inner),
            in_specs=[
                pl.BlockSpec((tile_m, lane), in_map),
                pl.BlockSpec((tile_m, lane), in_map),
            ],
            out_specs=pl.BlockSpec((1, 2, group, 128), out_map),
            scratch_shapes=[
                pltpu.VMEM((group, lane), jnp.float32),   # SSE partial
                pltpu.VMEM((group, lane), jnp.float32),   # SAE partial
            ],
        ),
        compiler_params=pltpu.CompilerParams(
            dimension_semantics=("parallel", "arbitrary"),
            vmem_limit_bytes=_VMEM_LIMIT_BYTES),
        cost_estimate=pl.CostEstimate(
            flops=5 * total,
            transcendentals=0,
            bytes_accessed=2 * total * x.dtype.itemsize),
    )(x2, y2)

    # Final tiny combine over (<=2 chunks) x (group, 128) folded partials.
    sse = jnp.sum(out[:, 0])
    sae = jnp.sum(out[:, 1])
    lw0 = jnp.float32(w0 * inv_n) * sse            # weighted MSE
    lw1 = jnp.float32(w1 * inv_n) * sae            # weighted MAE
    return jnp.stack([lw0, lw1, lw0 + lw1])


class CombinedLoss:
    """JAX/Pallas port of toddleocr CombinedLoss with a fixed synthetic config."""

    def __init__(self, loss_config_list=None):
        assert isinstance(loss_config_list, list), "operator config should be a list"
        self.loss_names = []
        self.loss_weight = []
        for config in loss_config_list:
            assert isinstance(config, dict) and len(config) == 1, "yaml format error"
            name = list(config)[0]
            param = dict(config[name])
            assert "weight" in param, (
                "weight must be in param, but param just contains {}".format(param.keys())
            )
            self.loss_weight.append(param.pop("weight"))
            self.loss_names.append(name)
        # TODO(synk): generic `eval(name)(**param)` loss instantiation has no
        # clean Pallas equivalent; this port fuses the fixed MSE+L1 pair.
        assert self.loss_names == ["MSELoss", "L1Loss"], (
            "this Pallas port fuses exactly [MSELoss, L1Loss]"
        )

    def forward(self, input, batch, **kwargs):
        out = combined_loss_pallas(
            input, batch, weights=tuple(float(w) for w in self.loss_weight)
        )
        loss_dict = {
            "loss_{}_{}".format(self.loss_names[0], 0): out[0],
            "loss_{}_{}".format(self.loss_names[1], 1): out[1],
            "loss": out[2],
        }
        return loss_dict

    __call__ = forward


def _reference(x, y, w0, w1):
    mse = jnp.mean((x - y) ** 2)
    mae = jnp.mean(jnp.abs(x - y))
    return w0 * mse, w1 * mae, w0 * mse + w1 * mae


if __name__ == "__main__":
    key = jax.random.PRNGKey(0)
    keys = jax.random.split(key, 8)

    loss_cfg = [{"MSELoss": {"weight": 0.6}}, {"L1Loss": {"weight": 0.4}}]
    module = CombinedLoss(loss_cfg)

    # --- small demo shape (single-block fast path, small row pad) ------------
    x = jax.random.normal(keys[0], (2, 4, 16, 16), dtype=jnp.float32)
    batch = jax.random.normal(keys[1], (2, 4, 16, 16), dtype=jnp.float32)
    out = module(x, batch)
    jax.block_until_ready(out["loss"])
    r0, r1, rt = _reference(x, batch, 0.6, 0.4)
    assert jnp.allclose(out["loss_MSELoss_0"], r0, rtol=1e-5, atol=1e-6)
    assert jnp.allclose(out["loss_L1Loss_1"], r1, rtol=1e-5, atol=1e-6)
    assert jnp.allclose(out["loss"], rt, rtol=1e-5, atol=1e-6)

    # --- large, evenly tiled shape: multi-tile + 2-chunk unmasked path -------
    xb = jax.random.normal(keys[2], (4, 8, 128, 512), dtype=jnp.float32)
    yb = jax.random.normal(keys[3], (4, 8, 128, 512), dtype=jnp.float32)
    out_b = module(xb, yb)
    jax.block_until_ready(out_b["loss"])
    r0, r1, rt = _reference(xb, yb, 0.6, 0.4)
    assert jnp.allclose(out_b["loss_MSELoss_0"], r0, rtol=1e-4)
    assert jnp.allclose(out_b["loss_L1Loss_1"], r1, rtol=1e-4)
    assert jnp.allclose(out_b["loss"], rt, rtol=1e-4)

    # --- ragged multi-tile shape: partial tile + phantom tile, no pad copy ---
    xr = jax.random.normal(keys[4], (5, 8, 128, 512), dtype=jnp.float32)
    yr = jax.random.normal(keys[5], (5, 8, 128, 512), dtype=jnp.float32)
    out_r = module(xr, yr)
    jax.block_until_ready(out_r["loss"])
    r0, r1, rt = _reference(xr, yr, 0.6, 0.4)
    assert jnp.allclose(out_r["loss_MSELoss_0"], r0, rtol=1e-4)
    assert jnp.allclose(out_r["loss_L1Loss_1"], r1, rtol=1e-4)
    assert jnp.allclose(out_r["loss"], rt, rtol=1e-4)

    # --- odd tiny shape: lane fallback (128) + small pad path ----------------
    xo = jax.random.normal(keys[6], (7, 9, 13), dtype=jnp.float32)
    yo = jax.random.normal(keys[7], (7, 9, 13), dtype=jnp.float32)
    out_o = module(xo, yo)
    jax.block_until_ready(out_o["loss"])
    r0, r1, rt = _reference(xo, yo, 0.6, 0.4)
    assert jnp.allclose(out_o["loss_MSELoss_0"], r0, rtol=1e-5, atol=1e-6)
    assert jnp.allclose(out_o["loss_L1Loss_1"], r1, rtol=1e-5, atol=1e-6)
    assert jnp.allclose(out_o["loss"], rt, rtol=1e-5, atol=1e-6)

    print("KERNEL_OK")
</pallas_src>

<mosaic_0001>
module attributes {stable_mosaic.version = 11 : i64} {
  func.func @kernel(%arg0: i32, %arg1: i32, %arg2: memref<8x512xf32, #tpu.memory_space<vmem>>, %arg3: memref<8x512xf32, #tpu.memory_space<vmem>>, %arg4: memref<1x2x8x128xf32, #tpu.memory_space<vmem>>, %arg5: memref<8x512xf32, #tpu.memory_space<vmem>>, %arg6: memref<8x512xf32, #tpu.memory_space<vmem>>) attributes {dimension_semantics = [#tpu.dimension_semantics<parallel>, #tpu.dimension_semantics<arbitrary>], iteration_bounds = array<i64: 1, 1>, scalar_prefetch = 0 : i64, scratch_operands = 2 : i64, tpu.core_type = #tpu.core_type<tc>, window_params = [{transform_indices = @transform_0, window_bounds = array<i64: 8, 512>}, {transform_indices = @transform_1, window_bounds = array<i64: 8, 512>}, {transform_indices = @transform_2, window_bounds = array<i64: 1, 2, 8, 128>}]} {
    %c0_i32 = arith.constant 0 : i32
    %0 = arith.cmpi eq, %arg1, %c0_i32 : i32
    %1 = arith.extui %0 : i1 to i32
    %c0_i32_0 = arith.constant 0 : i32
    %2 = arith.cmpi ne, %1, %c0_i32_0 : i32
    scf.if %2 {
      %cst_13 = arith.constant 0.000000e+00 : f32
      %24 = vector.broadcast %cst_13 : f32 to vector<8x512xf32>
      %c0_14 = arith.constant 0 : index
      %c0_15 = arith.constant 0 : index
      %25 = vector.load %arg5[%c0_14, %c0_15] : memref<8x512xf32, #tpu.memory_space<vmem>>, vector<8x512xf32>
      tpu.vector_store %arg5[%c0_14, %c0_15], %24 {strides = array<i32>} : memref<8x512xf32, #tpu.memory_space<vmem>>, vector<8x512xf32>,
      %cst_16 = arith.constant 0.000000e+00 : f32
      %26 = vector.broadcast %cst_16 : f32 to vector<8x512xf32>
      %c0_17 = arith.constant 0 : index
      %c0_18 = arith.constant 0 : index
      %27 = vector.load %arg6[%c0_17, %c0_18] : memref<8x512xf32, #tpu.memory_space<vmem>>, vector<8x512xf32>
      tpu.vector_store %arg6[%c0_17, %c0_18], %26 {strides = array<i32>} : memref<8x512xf32, #tpu.memory_space<vmem>>, vector<8x512xf32>,
    } else {
    }
    %cst = arith.constant 0.000000e+00 : f32
    %3 = vector.broadcast %cst : f32 to vector<8x512xf32>
    %c0_i32_1 = arith.constant 0 : i32
    %c8_i32 = arith.constant 8 : i32
    %4 = arith.muli %c0_i32_1, %c8_i32 : i32
    %5 = tpu.assume_multiple %4, 8 : i32
    %6 = arith.index_cast %5 : i32 to index
    %c0 = arith.constant 0 : index
    %7 = vector.load %arg2[%6, %c0] : memref<8x512xf32, #tpu.memory_space<vmem>>, vector<8x512xf32>
    %8 = arith.index_cast %5 : i32 to index
    %c0_2 = arith.constant 0 : index
    %9 = vector.load %arg3[%8, %c0_2] : memref<8x512xf32, #tpu.memory_space<vmem>>, vector<8x512xf32>
    %10 = arith.subf %7, %9 : vector<8x512xf32>
    %11 = arith.mulf %10, %10 : vector<8x512xf32>
    %12 = arith.addf %3, %11 : vector<8x512xf32>
    %13 = math.absf %10 : vector<8x512xf32>
    %14 = arith.addf %3, %13 : vector<8x512xf32>
    %c1_i32 = arith.constant 1 : i32
    %c0_3 = arith.constant 0 : index
    %c0_4 = arith.constant 0 : index
    %15 = vector.load %arg5[%c0_3, %c0_4] : memref<8x512xf32, #tpu.memory_space<vmem>>, vector<8x512xf32>
    %16 = arith.addf %15, %12 : vector<8x512xf32>
    %c0_5 = arith.constant 0 : index
    %c0_6 = arith.constant 0 : index
    %17 = vector.load %arg5[%c0_5, %c0_6] : memref<8x512xf32, #tpu.memory_space<vmem>>, vector<8x512xf32>
    tpu.vector_store %arg5[%c0_5, %c0_6], %16 {strides = array<i32>} : memref<8x512xf32, #tpu.memory_space<vmem>>, vector<8x512xf32>,
    %c0_7 = arith.constant 0 : index
    %c0_8 = arith.constant 0 : index
    %18 = vector.load %arg6[%c0_7, %c0_8] : memref<8x512xf32, #tpu.memory_space<vmem>>, vector<8x512xf32>
    %19 = arith.addf %18, %14 : vector<8x512xf32>
    %c0_9 = arith.constant 0 : index
    %c0_10 = arith.constant 0 : index
    %20 = vector.load %arg6[%c0_9, %c0_10] : memref<8x512xf32, #tpu.memory_space<vmem>>, vector<8x512xf32>
    tpu.vector_store %arg6[%c0_9, %c0_10], %19 {strides = array<i32>} : memref<8x512xf32, #tpu.memory_space<vmem>>, vector<8x512xf32>,
    %c0_i32_11 = arith.constant 0 : i32
    %21 = arith.cmpi eq, %arg1, %c0_i32_11 : i32
    %22 = arith.extui %21 : i1 to i32
    %c0_i32_12 = arith.constant 0 : i32
    %23 = arith.cmpi ne, %22, %c0_i32_12 : i32
    scf.if %23 {
      %c0_13 = arith.constant 0 : index
      %c0_14 = arith.constant 0 : index
      %24 = vector.load %arg5[%c0_13, %c0_14] : memref<8x512xf32, #tpu.memory_space<vmem>>, vector<8x512xf32>
      %25 = vector.extract_strided_slice %24 {offsets = [0, 0], sizes = [8, 128], strides = [1, 1]} : vector<8x512xf32> to vector<8x128xf32>
      %26 = vector.extract_strided_slice %24 {offsets = [0, 128], sizes = [8, 128], strides = [1, 1]} : vector<8x512xf32> to vector<8x128xf32>
      %27 = arith.addf %25, %26 : vector<8x128xf32>
      %28 = vector.extract_strided_slice %24 {offsets = [0, 256], sizes = [8, 128], strides = [1, 1]} : vector<8x512xf32> to vector<8x128xf32>
      %29 = arith.addf %27, %28 : vector<8x128xf32>
      %30 = vector.extract_strided_slice %24 {offsets = [0, 384], sizes = [8, 128], strides = [1, 1]} : vector<8x512xf32> to vector<8x128xf32>
      %31 = arith.addf %29, %30 : vector<8x128xf32>
      %c0_15 = arith.constant 0 : index
      %c0_16 = arith.constant 0 : index
      %c0_17 = arith.constant 0 : index
      %c0_18 = arith.constant 0 : index
      %32 = vector.load %arg4[%c0_15, %c0_16, %c0_17, %c0_18] : memref<1x2x8x128xf32, #tpu.memory_space<vmem>>, vector<1x1x8x128xf32>
      %33 = vector.shape_cast %32 : vector<1x1x8x128xf32> to vector<8x128xf32>
      %34 = vector.shape_cast %31 : vector<8x128xf32> to vector<1x1x8x128xf32>
      tpu.vector_store %arg4[%c0_15, %c0_16, %c0_17, %c0_18], %34 {strides = array<i32>} : memref<1x2x8x128xf32, #tpu.memory_space<vmem>>, vector<1x1x8x128xf32>,
      %c0_19 = arith.constant 0 : index
      %c0_20 = arith.constant 0 : index
      %35 = vector.load %arg6[%c0_19, %c0_20] : memref<8x512xf32, #tpu.memory_space<vmem>>, vector<8x512xf32>
      %36 = vector.extract_strided_slice %35 {offsets = [0, 0], sizes = [8, 128], strides = [1, 1]} : vector<8x512xf32> to vector<8x128xf32>
      %37 = vector.extract_strided_slice %35 {offsets = [0, 128], sizes = [8, 128], strides = [1, 1]} : vector<8x512xf32> to vector<8x128xf32>
      %38 = arith.addf %36, %37 : vector<8x128xf32>
      %39 = vector.extract_strided_slice %35 {offsets = [0, 256], sizes = [8, 128], strides = [1, 1]} : vector<8x512xf32> to vector<8x128xf32>
      %40 = arith.addf %38, %39 : vector<8x128xf32>
      %41 = vector.extract_strided_slice %35 {offsets = [0, 384], sizes = [8, 128], strides = [1, 1]} : vector<8x512xf32> to vector<8x128xf32>
      %42 = arith.addf %40, %41 : vector<8x128xf32>
      %c0_21 = arith.constant 0 : index
      %c1 = arith.constant 1 : index
      %c0_22 = arith.constant 0 : index
      %c0_23 = arith.constant 0 : index
      %43 = vector.load %arg4[%c0_21, %c1, %c0_22, %c0_23] : memref<1x2x8x128xf32, #tpu.memory_space<vmem>>, vector<1x1x8x128xf32>
      %44 = vector.shape_cast %43 : vector<1x1x8x128xf32> to vector<8x128xf32>
      %45 = vector.shape_cast %42 : vector<8x128xf32> to vector<1x1x8x128xf32>
      tpu.vector_store %arg4[%c0_21, %c1, %c0_22, %c0_23], %45 {strides = array<i32>} : memref<1x2x8x128xf32, #tpu.memory_space<vmem>>, vector<1x1x8x128xf32>,
    } else {
    }
    return
  }
  func.func @transform_0(%arg0: i32, %arg1: i32) -> (i32, i32) {
    %c1_i32 = arith.constant 1 : i32
    %0 = arith.muli %arg0, %c1_i32 : i32
    %1 = arith.addi %0, %arg1 : i32
    %c0_i32 = arith.constant 0 : i32
    %c0_i32_0 = arith.constant 0 : i32
    return %1, %c0_i32 : i32, i32
  }
  func.func @transform_1(%arg0: i32, %arg1: i32) -> (i32, i32) {
    %c1_i32 = arith.constant 1 : i32
    %0 = arith.muli %arg0, %c1_i32 : i32
    %1 = arith.addi %0, %arg1 : i32
    %c0_i32 = arith.constant 0 : i32
    %c0_i32_0 = arith.constant 0 : i32
    return %1, %c0_i32 : i32, i32
  }
  func.func @transform_2(%arg0: i32, %arg1: i32) -> (i32, i32, i32, i32) {
    %c0_i32 = arith.constant 0 : i32
    %c0_i32_0 = arith.constant 0 : i32
    %c0_i32_1 = arith.constant 0 : i32
    %c0_i32_2 = arith.constant 0 : i32
    return %arg0, %c0_i32, %c0_i32_0, %c0_i32_1 : i32, i32, i32, i32
  }
}

</mosaic_0001>

<llo_original>
// kernel: combined_loss_pallas.1
$region0: #{combined_loss_pallas.1}
  #allocation0 [shape = 'u32[]', space=smem, size = 0x4, offset = 0x4, fixed_abs, tag = 'smem constant byte address 0x4 - core index']
  #allocation1 [shape = 'u32[72,128]{1,0:T(1,128)}', space=vmem, size = 0x9000, scoped, tag = 'internal scratch']
  #allocation2 [shape = 'f32[8,512]{1,0:T(8,128)}', space=vmem, size = 0x4000, scoped, tag = 'scratch operand']
  #allocation3 [shape = 'f32[8,512]{1,0:T(8,128)}', space=vmem, size = 0x4000, scoped, tag = 'scratch operand']
  %s0 = inlined_call_operand.vmem [shape: f32[8,512], index: 0, kind: input, shape index: {}]
  %s1 = inlined_call_operand.vmem [shape: f32[8,512], index: 1, kind: input, shape index: {}]
  %s2 = inlined_call_operand.vmem [shape: f32[1,2,8,128], index: 2, kind: output, shape index: {}]
  %s3 = sld [smem:[#allocation0]]
  $region26: #{combined_loss_pallas.1} parent=0
    _
  %s5 = ssub.s32 1, %s3
  %s6 = scalar_select 0, %s5, %s3
  // Predicated region
  $region2: #{combined_loss_pallas.1} parent=0 // pred_check
    _
  $region3: #{combined_loss_pallas.1} parent=0 // pred_check_branch
    %8 = sbr.rel (0) target = $region5
  $region4: #{combined_loss_pallas.1} parent=0 // pred_region
    %s9 = sadd.s32 0, 0
    %p10 = scmp.lt.s32.totalorder %s9, 0
    %s11 = scalar_select %p10, %s9, 0
    %s12 = smul.addr %s11, 4
    %s13 = smul.addr %s12, 8
    %s14 = scalar_lea.vmem %s0, %s13
    %s15 = sadd.s32 0, 0
  $region5: #{combined_loss_pallas.1} parent=0 // pred_fallthru
    _
  // Predicated region
  $region6: #{combined_loss_pallas.1} parent=0 // pred_check
    _
  $region7: #{combined_loss_pallas.1} parent=0 // pred_check_branch
    %17 = sbr.rel (0) target = $region9
  $region8: #{combined_loss_pallas.1} parent=0 // pred_region
    %s18 = sadd.s32 0, 0
    %p19 = scmp.lt.s32.totalorder %s18, 0
    %s20 = scalar_select %p19, %s18, 0
    %s21 = smul.addr %s20, 4
    %s22 = smul.addr %s21, 8
    %s23 = scalar_lea.vmem %s1, %s22
    %s24 = sadd.s32 0, 0
  $region9: #{combined_loss_pallas.1} parent=0 // pred_fallthru
    _
  %s25 = sadd.s32 0, 0
  %p26 = scmp.lt.s32.totalorder %s25, 0
  %s27 = scalar_select %p26, %s25, 0
  %s28 = smul.addr %s27, 4
  %s29 = smul.addr %s28, 8
  %s30 = scalar_lea.vmem %s0, %s29
  %s31 = sadd.s32 0, 0
  %p32 = scmp.lt.s32.totalorder %s31, 0
  %s33 = scalar_select %p32, %s31, 0
  %s34 = smul.addr %s33, 4
  %s35 = smul.addr %s34, 8
  %s36 = scalar_lea.vmem %s1, %s35
  %s37 = sadd.s32 0, 0
  %p38 = scmp.lt.s32.totalorder %s37, 0
  %s39 = scalar_select %p38, %s37, 0
  %s40 = smul.addr %s39, 4
  %s41 = smul.addr %s40, 8
  %s42 = scalar_lea.vmem %s0, %s41
  %s43 = sadd.s32 0, 0
  %s44 = sadd.s32 0, 0
  %p45 = scmp.lt.s32.totalorder %s44, 0
  %s46 = scalar_select %p45, %s44, 0
  %s47 = smul.addr %s46, 4
  %s48 = smul.addr %s47, 8
  %s49 = scalar_lea.vmem %s1, %s48
  %s50 = sadd.s32 0, 0
  %p51 = scmp.eq.s32.totalorder 0, 0
  // Predicated region
  $region10: #{combined_loss_pallas.1} parent=0 // pred_check
    %p52 = pneg %p51
  $region11: #{combined_loss_pallas.1} parent=0 // pred_check_branch
    %54 = sbr.rel (%p52) target = $region13
  $region12: #{combined_loss_pallas.1} parent=0 // pred_region
    %55 = vst [vmem:[#allocation2] sm:$0xff] 0.0
    %56 = vst [vmem:[#allocation2 + $0x8] sm:$0xff] 0.0
    %57 = vst [vmem:[#allocation2 + $0x10] sm:$0xff] 0.0
    %58 = vst [vmem:[#allocation2 + $0x18] sm:$0xff] 0.0
    %59 = vst [vmem:[#allocation3] sm:$0xff] 0.0
    %60 = vst [vmem:[#allocation3 + $0x8] sm:$0xff] 0.0
    %61 = vst [vmem:[#allocation3 + $0x10] sm:$0xff] 0.0
    %62 = vst [vmem:[#allocation3 + $0x18] sm:$0xff] 0.0
  $region13: #{combined_loss_pallas.1} parent=0 // pred_fallthru
    _
  %s63 = smul.u32 0, 4
  %s64 = smul.addr %s63, 8
  %s65 = scalar_lea.vmem %s42, %s64
  %v66 = vld [vmem:[%s65] sm:$0xff]
  %v67 = vld [vmem:[%s65 + $0x8] sm:$0xff]
  %v68 = vld [vmem:[%s65 + $0x10] sm:$0xff]
  %v69 = vld [vmem:[%s65 + $0x18] sm:$0xff]
  %s70 = smul.addr %s63, 8
  %s71 = scalar_lea.vmem %s49, %s70
  %v72 = vld [vmem:[%s71] sm:$0xff]
  %v73 = vld [vmem:[%s71 + $0x8] sm:$0xff]
  %v74 = vld [vmem:[%s71 + $0x10] sm:$0xff]
  %v75 = vld [vmem:[%s71 + $0x18] sm:$0xff]
  %v76 = vsub.f32 %v66, %v72
  %v77 = vsub.f32 %v67, %v73
  %v78 = vsub.f32 %v68, %v74
  %v79 = vsub.f32 %v69, %v75
  %v80 = vmul.f32 %v76, %v76
  %v81 = vmul.f32 %v77, %v77
  %v82 = vmul.f32 %v78, %v78
  %v83 = vmul.f32 %v79, %v79
  %v84 = vadd.f32 %v80, 0.0
  %v85 = vadd.f32 %v81, 0.0
  %v86 = vadd.f32 %v82, 0.0
  %v87 = vadd.f32 %v83, 0.0
  %v88 = vand.u32 2147483647, %v76
  %v89 = vand.u32 2147483647, %v77
  %v90 = vand.u32 2147483647, %v78
  %v91 = vand.u32 2147483647, %v79
  %v92 = vadd.f32 %v88, 0.0
  %v93 = vadd.f32 %v89, 0.0
  %v94 = vadd.f32 %v90, 0.0
  %v95 = vadd.f32 %v91, 0.0
  %v96 = vld [vmem:[#allocation2] sm:$0xff]
  %v97 = vld [vmem:[#allocation2 + $0x8] sm:$0xff]
  %v98 = vld [vmem:[#allocation2 + $0x10] sm:$0xff]
  %v99 = vld [vmem:[#allocation2 + $0x18] sm:$0xff]
  %v100 = vadd.f32 %v96, %v84
  %v101 = vadd.f32 %v97, %v85
  %v102 = vadd.f32 %v98, %v86
  %v103 = vadd.f32 %v99, %v87
  %104 = vst [vmem:[#allocation2] sm:$0xff] %v100
  %105 = vst [vmem:[#allocation2 + $0x8] sm:$0xff] %v101
  %106 = vst [vmem:[#allocation2 + $0x10] sm:$0xff] %v102
  %107 = vst [vmem:[#allocation2 + $0x18] sm:$0xff] %v103
  %v108 = vld [vmem:[#allocation3] sm:$0xff]
  %v109 = vld [vmem:[#allocation3 + $0x8] sm:$0xff]
  %v110 = vld [vmem:[#allocation3 + $0x10] sm:$0xff]
  %v111 = vld [vmem:[#allocation3 + $0x18] sm:$0xff]
  %v112 = vadd.f32 %v108, %v92
  %v113 = vadd.f32 %v109, %v93
  %v114 = vadd.f32 %v110, %v94
  %v115 = vadd.f32 %v111, %v95
  %116 = vst [vmem:[#allocation3] sm:$0xff] %v112
  %117 = vst [vmem:[#allocation3 + $0x8] sm:$0xff] %v113
  %118 = vst [vmem:[#allocation3 + $0x10] sm:$0xff] %v114
  %119 = vst [vmem:[#allocation3 + $0x18] sm:$0xff] %v115
  // Predicated region
  $region14: #{combined_loss_pallas.1} parent=0 // pred_check
    %p120 = pneg %p51
  $region15: #{combined_loss_pallas.1} parent=0 // pred_check_branch
    %122 = sbr.rel (%p120) target = $region17
  $region16: #{combined_loss_pallas.1} parent=0 // pred_region
    %v123 = vld [vmem:[#allocation2] sm:$0xff]
    %v124 = vld [vmem:[#allocation2 + $0x8] sm:$0xff]
    %v125 = vld [vmem:[#allocation2 + $0x10] sm:$0xff]
    %v126 = vld [vmem:[#allocation2 + $0x18] sm:$0xff]
    %v127 = vadd.f32 %v123, %v124
    %v128 = vadd.f32 %v127, %v125
    %v129 = vadd.f32 %v128, %v126
    %130 = vst [vmem:[%s2] sm:$0xff] %v129
    %v131 = vld [vmem:[#allocation3] sm:$0xff]
    %v132 = vld [vmem:[#allocation3 + $0x8] sm:$0xff]
    %v133 = vld [vmem:[#allocation3 + $0x10] sm:$0xff]
    %v134 = vld [vmem:[#allocation3 + $0x18] sm:$0xff]
    %v135 = vadd.f32 %v131, %v132
    %v136 = vadd.f32 %v135, %v133
    %v137 = vadd.f32 %v136, %v134
    %s138 = scalar_lea.vmem %s2, 8
    %139 = vst [vmem:[%s138] sm:$0xff] %v137
  $region17: #{combined_loss_pallas.1} parent=0 // pred_fallthru
    _
  // Predicated region
  $region18: #{combined_loss_pallas.1} parent=0 // pred_check
    _
  $region19: #{combined_loss_pallas.1} parent=0 // pred_check_branch
    %141 = sbr.rel (0) target = $region21
  $region20: #{combined_loss_pallas.1} parent=0 // pred_region
    _
  $region21: #{combined_loss_pallas.1} parent=0 // pred_fallthru
    _
  // Predicated region
  $region22: #{combined_loss_pallas.1} parent=0 // pred_check
    _
  $region23: #{combined_loss_pallas.1} parent=0 // pred_check_branch
    %143 = sbr.rel (0) target = $region25
  $region24: #{combined_loss_pallas.1} parent=0 // pred_region
    _
  $region25: #{combined_loss_pallas.1} parent=0 // pred_fallthru
    _

</llo_original>
